<compile_context>
chip_gen: v7x
topology: tpu7x:2x2x1
jax: 0.10.0
libtpu: 0.0.40
codegen_flags: <defaults>
</compile_context>

<pallas_src>
import math
import functools

import jax
import jax.numpy as jnp
from jax.experimental import pallas as pl
from jax.experimental.pallas import tpu as pltpu


def ffn_kernel(x_ref, w1_ref, b1_ref, w2_ref, b2_ref, o_ref, acc_ref):
    # x_ref:  (TM, D_pad) bf16            -- one tile of tokens
    # w1_ref: (D_pad, TF) bf16, b1_ref: (1, TF) bf16     -- F-chunk (or resident)
    # w2_ref: (TF, D_pad) bf16, b2_ref: (1, D_pad) bf16  -- F-chunk / resident
    # o_ref:  (TM, D_pad) out dtype
    # acc_ref:(TM, D_pad) f32 scratch (persists across the F axis)
    fi = pl.program_id(1)

    @pl.when(fi == 0)
    def _():
        acc_ref[...] = jnp.zeros_like(acc_ref)

    # linear1 partial: bf16 x bf16 on the MXU, f32 accumulation
    h = jnp.dot(x_ref[...], w1_ref[...], preferred_element_type=jnp.float32)
    h = h + b1_ref[...].astype(jnp.float32)

    # exact GELU (erf-based, matches torch.nn.functional.gelu default).
    # Elementwise per hidden column, so F-chunking is mathematically exact.
    h = 0.5 * h * (1.0 + jax.lax.erf(h * (1.0 / math.sqrt(2.0))))

    # dropout(p=0.2): identity in eval mode (see TODO at top of file)

    # linear2 partial: cast activation back to bf16 for the MXU, f32 accum
    acc_ref[...] += jnp.dot(h.astype(w2_ref.dtype), w2_ref[...],
                            preferred_element_type=jnp.float32)

    @pl.when(fi == pl.num_programs(1) - 1)
    def _():
        o_ref[...] = (acc_ref[...]
                      + b2_ref[...].astype(jnp.float32)).astype(o_ref.dtype)


def _round_up(x, m):
    return (x + m - 1) // m * m


def _vmem_capacity_bytes():
    try:
        return int(pltpu.get_tpu_info().vmem_capacity_bytes)
    except Exception:
        return 64 << 20  # conservative fallback (v7x per-TC VMEM)


def prepare_params(w1_t, b1, w2_t, b2, *, param_dtype=jnp.bfloat16):
    """Pad to lane-dense multiples of 128 and cast to bf16 ONCE (hot path stays clean).

    w1_t: (input_dim, ff_dim) pre-transposed linear1 weight
    w2_t: (ff_dim, input_dim) pre-transposed linear2 weight
    """
    input_dim, ff_dim = w1_t.shape
    d_pad = _round_up(input_dim, 128)
    f_pad = _round_up(ff_dim, 128)
    w1p = jnp.pad(w1_t, ((0, d_pad - input_dim), (0, f_pad - ff_dim))).astype(param_dtype)
    w2p = jnp.pad(w2_t, ((0, f_pad - ff_dim), (0, d_pad - input_dim))).astype(param_dtype)
    b1p = jnp.pad(b1, (0, f_pad - ff_dim)).reshape(1, f_pad).astype(param_dtype)
    b2p = jnp.pad(b2, (0, d_pad - input_dim)).reshape(1, d_pad).astype(param_dtype)
    return w1p, b1p, w2p, b2p


@functools.partial(jax.jit, static_argnames=("block_m",))
def feed_forward_network(x, w1p, b1p, w2p, b2p, *, block_m=512):
    """x: (batch, seq, input_dim) -> (batch, seq, input_dim).

    Params must come from prepare_params (pre-padded, pre-cast bf16).
    """
    batch, seq, input_dim = x.shape
    d_pad, f_pad = w1p.shape
    m = batch * seq
    out_dtype = x.dtype
    out_itemsize = jnp.dtype(out_dtype).itemsize

    # --- M tiling: lane-dense, >=2 grid steps when possible (v7x dual-TC) ---
    m_ceil = _round_up(m, 128)
    tm = min(block_m, m_ceil)
    if tm == m_ceil and m_ceil >= 256:
        tm = _round_up(m_ceil // 2, 128)
    m_pad = _round_up(m, tm)
    n_m = m_pad // tm

    # --- F tiling: largest 128-multiple divisor of f_pad that fits VMEM ------
    vmem_cap = _vmem_capacity_bytes()
    budget = int(0.6 * vmem_cap)

    def footprint(tf, n_f):
        nbuf_w = 1 if n_f == 1 else 2                  # resident -> single buffer
        return (2 * tm * d_pad * 2                     # x tiles (bf16, 2 buffers)
                + 2 * tm * d_pad * out_itemsize        # out tiles (2 buffers)
                + nbuf_w * (2 * d_pad * tf + tf) * 2   # w1 + w2 + b1 chunks (bf16)
                + d_pad * 2                            # b2 (resident, 1 buffer)
                + tm * d_pad * 4                       # f32 accumulator scratch
                + tm * tf * 4)                         # f32 h working set

    tf = 128
    for cand in [f_pad] + [c for c in (8192, 4096, 2048, 1024, 512, 256, 128)
                           if c < f_pad and f_pad % c == 0]:
        if footprint(cand, f_pad // cand) <= budget:
            tf = cand
            break
    n_f = f_pad // tf
    resident = (n_f == 1)

    vmem_limit = int(1.4 * footprint(tf, n_f)) + (4 << 20)
    vmem_limit = max(16 << 20, min(vmem_limit, int(0.85 * vmem_cap)))

    # --- x: flatten, cast to bf16 for the MXU, zero-pad (numerically exact) --
    x2d = x.reshape(m, input_dim).astype(jnp.bfloat16)
    if (m_pad, d_pad) != (m, input_dim):
        x2d = jnp.pad(x2d, ((0, m_pad - m), (0, d_pad - input_dim)))

    def wspec(shape, index_map, single_buffer):
        # Constant-index operands never re-DMA; single-buffer them to save VMEM.
        if single_buffer:
            return pl.BlockSpec(shape, index_map, pipeline_mode=pl.Buffered(1))
        return pl.BlockSpec(shape, index_map)

    cost = pl.CostEstimate(
        flops=4 * m_pad * d_pad * f_pad,
        transcendentals=m_pad * f_pad,
        bytes_accessed=(m_pad * d_pad * (2 + out_itemsize)          # x read + out write
                        + (2 * d_pad * f_pad + f_pad + d_pad) * 2),  # weights/biases
    )

    out2d = pl.pallas_call(
        ffn_kernel,
        out_shape=jax.ShapeDtypeStruct((m_pad, d_pad), out_dtype),
        grid=(n_m, n_f),
        in_specs=[
            pl.BlockSpec((tm, d_pad), lambda i, j: (i, 0)),       # x tile
            wspec((d_pad, tf), lambda i, j: (0, j), resident),    # w1 chunk
            wspec((1, tf), lambda i, j: (0, j), resident),        # b1 chunk
            wspec((tf, d_pad), lambda i, j: (j, 0), resident),    # w2 chunk
            wspec((1, d_pad), lambda i, j: (0, 0), True),         # b2 (resident)
        ],
        out_specs=pl.BlockSpec((tm, d_pad), lambda i, j: (i, 0)),
        scratch_shapes=[pltpu.VMEM((tm, d_pad), jnp.float32)],
        compiler_params=pltpu.CompilerParams(
            dimension_semantics=("parallel", "arbitrary"),
            vmem_limit_bytes=vmem_limit,
        ),
        cost_estimate=cost,
    )(x2d, w1p, b1p, w2p, b2p)

    return out2d[:m, :input_dim].reshape(batch, seq, input_dim)


def init_params(key, input_dim, ff_dim):
    """Matches nn.Linear default init U(-1/sqrt(fan_in), 1/sqrt(fan_in)).

    Weights are PRE-TRANSPOSED as (in_features, out_features); pass the result
    through prepare_params() once before calling feed_forward_network.
    """
    k1, k2, k3, k4 = jax.random.split(key, 4)
    bound1 = 1.0 / math.sqrt(input_dim)
    bound2 = 1.0 / math.sqrt(ff_dim)
    w1_t = jax.random.uniform(k1, (input_dim, ff_dim), jnp.float32, -bound1, bound1)
    b1 = jax.random.uniform(k2, (ff_dim,), jnp.float32, -bound1, bound1)
    w2_t = jax.random.uniform(k3, (ff_dim, input_dim), jnp.float32, -bound2, bound2)
    b2 = jax.random.uniform(k4, (input_dim,), jnp.float32, -bound2, bound2)
    return w1_t, b1, w2_t, b2


if __name__ == "__main__":
    key = jax.random.PRNGKey(0)
    kx, kp = jax.random.split(key)

    batch, seq, input_dim, ff_dim = 2, 8, 32, 64
    x = jax.random.normal(kx, (batch, seq, input_dim), jnp.float32)
    w1_t, b1, w2_t, b2 = init_params(kp, input_dim, ff_dim)

    # One-time pad + bf16 cast (kept out of the per-call hot path).
    w1p, b1p, w2p, b2p = prepare_params(w1_t, b1, w2_t, b2)

    out = feed_forward_network(x, w1p, b1p, w2p, b2p)
    out = jax.block_until_ready(out)

    # Pure-JAX reference mimicking the kernel's bf16-operand / f32-accumulate
    # numerics (eval-mode dropout = identity).
    xf = x.astype(jnp.bfloat16).astype(jnp.float32)
    w1f = w1p[:input_dim, :ff_dim].astype(jnp.float32)
    b1f = b1p[0, :ff_dim].astype(jnp.float32)
    w2f = w2p[:ff_dim, :input_dim].astype(jnp.float32)
    b2f = b2p[0, :input_dim].astype(jnp.float32)
    h_ref = xf @ w1f + b1f
    h_ref = 0.5 * h_ref * (1.0 + jax.lax.erf(h_ref / math.sqrt(2.0)))
    h_ref = h_ref.astype(jnp.bfloat16).astype(jnp.float32)
    ref = h_ref @ w2f + b2f

    assert out.shape == (batch, seq, input_dim)
    assert jnp.allclose(out, ref, atol=2e-2, rtol=2e-2), \
        float(jnp.max(jnp.abs(out - ref)))

    print("KERNEL_OK")
</pallas_src>

<mosaic_0001>
module attributes {stable_mosaic.version = 11 : i64} {
  func.func @ffn_kernel(%arg0: i32, %arg1: i32, %arg2: memref<128x128xbf16, #tpu.memory_space<vmem>>, %arg3: memref<128x128xbf16, #tpu.memory_space<vmem>>, %arg4: memref<1x128xbf16, #tpu.memory_space<vmem>>, %arg5: memref<128x128xbf16, #tpu.memory_space<vmem>>, %arg6: memref<1x128xbf16, #tpu.memory_space<vmem>>, %arg7: memref<128x128xf32, #tpu.memory_space<vmem>>, %arg8: memref<128x128xf32, #tpu.memory_space<vmem>>) attributes {dimension_semantics = [#tpu.dimension_semantics<parallel>, #tpu.dimension_semantics<arbitrary>], iteration_bounds = array<i64: 1, 1>, scalar_prefetch = 0 : i64, scratch_operands = 1 : i64, tpu.core_type = #tpu.core_type<tc>, window_params = [{transform_indices = @transform_0, window_bounds = array<i64: 128, 128>}, {pipeline_mode = #tpu.pipeline_mode<synchronous>, transform_indices = @transform_1, window_bounds = array<i64: 128, 128>}, {pipeline_mode = #tpu.pipeline_mode<synchronous>, transform_indices = @transform_2, window_bounds = array<i64: 1, 128>}, {pipeline_mode = #tpu.pipeline_mode<synchronous>, transform_indices = @transform_3, window_bounds = array<i64: 128, 128>}, {pipeline_mode = #tpu.pipeline_mode<synchronous>, transform_indices = @transform_4, window_bounds = array<i64: 1, 128>}, {transform_indices = @transform_5, window_bounds = array<i64: 128, 128>}]} {
    %c0_i32 = arith.constant 0 : i32
    %0 = arith.cmpi eq, %arg1, %c0_i32 : i32
    %1 = arith.extui %0 : i1 to i32
    %c0_i32_0 = arith.constant 0 : i32
    %2 = arith.cmpi ne, %1, %c0_i32_0 : i32
    scf.if %2 {
      %cst_18 = arith.constant 0.000000e+00 : f32
      %27 = vector.broadcast %cst_18 : f32 to vector<128x128xf32>
      %c0_19 = arith.constant 0 : index
      %c0_20 = arith.constant 0 : index
      %28 = vector.load %arg8[%c0_19, %c0_20] : memref<128x128xf32, #tpu.memory_space<vmem>>, vector<128x128xf32>
      tpu.vector_store %arg8[%c0_19, %c0_20], %27 {strides = array<i32>} : memref<128x128xf32, #tpu.memory_space<vmem>>, vector<128x128xf32>,
    } else {
    }
    %c0 = arith.constant 0 : index
    %c0_1 = arith.constant 0 : index
    %3 = vector.load %arg2[%c0, %c0_1] : memref<128x128xbf16, #tpu.memory_space<vmem>>, vector<128x128xbf16>
    %c0_2 = arith.constant 0 : index
    %c0_3 = arith.constant 0 : index
    %4 = vector.load %arg3[%c0_2, %c0_3] : memref<128x128xbf16, #tpu.memory_space<vmem>>, vector<128x128xbf16>
    %cst = arith.constant dense<0.000000e+00> : vector<128x128xf32>
    %5 = tpu.matmul %3, %4, %cst {dimension_numbers = #tpu.dot_dimension_numbers<[1], [0], [0], [1], [0, 0, 1, 1], [], []>} : vector<128x128xbf16>, vector<128x128xbf16>, vector<128x128xf32> -> vector<128x128xf32>
    %c0_4 = arith.constant 0 : index
    %c0_5 = arith.constant 0 : index
    %6 = vector.load %arg4[%c0_4, %c0_5] : memref<1x128xbf16, #tpu.memory_space<vmem>>, vector<1x128xbf16>
    %7 = arith.extf %6 : vector<1x128xbf16> to vector<1x128xf32>
    %8 = vector.broadcast %7 : vector<1x128xf32> to vector<128x128xf32>
    %9 = arith.addf %5, %8 : vector<128x128xf32>
    %cst_6 = arith.constant 5.000000e-01 : f32
    %10 = vector.broadcast %cst_6 : f32 to vector<128x128xf32>
    %11 = arith.mulf %10, %9 : vector<128x128xf32>
    %cst_7 = arith.constant 0.707106769 : f32
    %12 = vector.broadcast %cst_7 : f32 to vector<128x128xf32>
    %13 = arith.mulf %9, %12 : vector<128x128xf32>
    %14 = math.erf %13 : vector<128x128xf32>
    %cst_8 = arith.constant 1.000000e+00 : f32
    %15 = vector.broadcast %cst_8 : f32 to vector<128x128xf32>
    %16 = arith.addf %15, %14 : vector<128x128xf32>
    %17 = arith.mulf %11, %16 : vector<128x128xf32>
    %c0_9 = arith.constant 0 : index
    %c0_10 = arith.constant 0 : index
    %18 = vector.load %arg8[%c0_9, %c0_10] : memref<128x128xf32, #tpu.memory_space<vmem>>, vector<128x128xf32>
    %19 = arith.truncf %17 : vector<128x128xf32> to vector<128x128xbf16>
    %c0_11 = arith.constant 0 : index
    %c0_12 = arith.constant 0 : index
    %20 = vector.load %arg5[%c0_11, %c0_12] : memref<128x128xbf16, #tpu.memory_space<vmem>>, vector<128x128xbf16>
    %cst_13 = arith.constant dense<0.000000e+00> : vector<128x128xf32>
    %21 = tpu.matmul %19, %20, %cst_13 {dimension_numbers = #tpu.dot_dimension_numbers<[1], [0], [0], [1], [0, 0, 1, 1], [], []>} : vector<128x128xbf16>, vector<128x128xbf16>, vector<128x128xf32> -> vector<128x128xf32>
    %22 = arith.addf %18, %21 : vector<128x128xf32>
    %c0_14 = arith.constant 0 : index
    %c0_15 = arith.constant 0 : index
    %23 = vector.load %arg8[%c0_14, %c0_15] : memref<128x128xf32, #tpu.memory_space<vmem>>, vector<128x128xf32>
    tpu.vector_store %arg8[%c0_14, %c0_15], %22 {strides = array<i32>} : memref<128x128xf32, #tpu.memory_space<vmem>>, vector<128x128xf32>,
    %c0_i32_16 = arith.constant 0 : i32
    %24 = arith.cmpi eq, %arg1, %c0_i32_16 : i32
    %25 = arith.extui %24 : i1 to i32
    %c0_i32_17 = arith.constant 0 : i32
    %26 = arith.cmpi ne, %25, %c0_i32_17 : i32
    scf.if %26 {
      %c0_18 = arith.constant 0 : index
      %c0_19 = arith.constant 0 : index
      %27 = vector.load %arg8[%c0_18, %c0_19] : memref<128x128xf32, #tpu.memory_space<vmem>>, vector<128x128xf32>
      %c0_20 = arith.constant 0 : index
      %c0_21 = arith.constant 0 : index
      %28 = vector.load %arg6[%c0_20, %c0_21] : memref<1x128xbf16, #tpu.memory_space<vmem>>, vector<1x128xbf16>
      %29 = arith.extf %28 : vector<1x128xbf16> to vector<1x128xf32>
      %30 = vector.broadcast %29 : vector<1x128xf32> to vector<128x128xf32>
      %31 = arith.addf %27, %30 : vector<128x128xf32>
      %c0_22 = arith.constant 0 : index
      %c0_23 = arith.constant 0 : index
      %32 = vector.load %arg7[%c0_22, %c0_23] : memref<128x128xf32, #tpu.memory_space<vmem>>, vector<128x128xf32>
      tpu.vector_store %arg7[%c0_22, %c0_23], %31 {strides = array<i32>} : memref<128x128xf32, #tpu.memory_space<vmem>>, vector<128x128xf32>,
    } else {
    }
    return
  }
  func.func @transform_0(%arg0: i32, %arg1: i32) -> (i32, i32) {
    %c0_i32 = arith.constant 0 : i32
    %c0_i32_0 = arith.constant 0 : i32
    return %arg0, %c0_i32 : i32, i32
  }
  func.func @transform_1(%arg0: i32, %arg1: i32) -> (i32, i32) {
    %c0_i32 = arith.constant 0 : i32
    %c0_i32_0 = arith.constant 0 : i32
    return %c0_i32, %arg1 : i32, i32
  }
  func.func @transform_2(%arg0: i32, %arg1: i32) -> (i32, i32) {
    %c0_i32 = arith.constant 0 : i32
    %c0_i32_0 = arith.constant 0 : i32
    return %c0_i32, %arg1 : i32, i32
  }
  func.func @transform_3(%arg0: i32, %arg1: i32) -> (i32, i32) {
    %c0_i32 = arith.constant 0 : i32
    %c0_i32_0 = arith.constant 0 : i32
    return %arg1, %c0_i32 : i32, i32
  }
  func.func @transform_4(%arg0: i32, %arg1: i32) -> (i32, i32) {
    %c0_i32 = arith.constant 0 : i32
    %c0_i32_0 = arith.constant 0 : i32
    %c0_i32_1 = arith.constant 0 : i32
    return %c0_i32, %c0_i32_0 : i32, i32
  }
  func.func @transform_5(%arg0: i32, %arg1: i32) -> (i32, i32) {
    %c0_i32 = arith.constant 0 : i32
    %c0_i32_0 = arith.constant 0 : i32
    return %arg0, %c0_i32 : i32, i32
  }
}

</mosaic_0001>

<llo_original>
// kernel: feed_forward_network.1
$region0: #{feed_forward_network.1}
  #allocation0 [shape = 'u32[]', space=smem, size = 0x4, offset = 0x4, fixed_abs, tag = 'smem constant byte address 0x4 - core index']
  #allocation1 [shape = 'u32[144,128]{1,0:T(1,128)}', space=vmem, size = 0x12000, scoped, tag = 'internal scratch']
  #allocation2 [shape = 'f32[128,128]{1,0:T(8,128)}', space=vmem, size = 0x10000, scoped, tag = 'scratch operand']
  %s0 = inlined_call_operand.vmem [shape: bf16[128,128], index: 0, kind: input, shape index: {}]
  %s1 = inlined_call_operand.vmem [shape: bf16[128,128], index: 1, kind: input, shape index: {}]
  %s2 = inlined_call_operand.vmem [shape: bf16[1,128], index: 2, kind: input, shape index: {}]
  %s3 = inlined_call_operand.hbm [shape: bf16[128,128], index: 3, kind: input, shape index: {}]
  %s4 = inlined_call_operand.vmem [shape: bf16[1,128], index: 4, kind: input, shape index: {}]
  %s5 = inlined_call_operand.vmem [shape: f32[128,128], index: 5, kind: output, shape index: {}]
  %s6 = sld [smem:[#allocation0]]
  $region42: #{feed_forward_network.1} parent=0
    _
  %s8 = ssub.s32 1, %s6
  %s9 = scalar_select 0, %s8, %s6
  $region1: #{feed_forward_network.1} parent=0
    #allocation3 [shape = 'u8[32768]{0}', space=vmem, size = 0x8000, scoped, tag = 'input window, operand 3, single buffered']
    #allocation4 [shape = 's32[1]{0}', space=sflag, size = 0x4, scoped, tag = 'scoped memory for feed_forward_network.1']
    %10 = vsyncpa [#allocation4], 0
    // Predicated region
    $region2: #{feed_forward_network.1} parent=1 // pred_check
      _
    $region3: #{feed_forward_network.1} parent=1 // pred_check_branch
      %12 = sbr.rel (0) target = $region5
    $region4: #{feed_forward_network.1} parent=1 // pred_region
      _
    $region5: #{feed_forward_network.1} parent=1 // pred_fallthru
      _
    // Predicated region
    $region6: #{feed_forward_network.1} parent=1 // pred_check
      _
    $region7: #{feed_forward_network.1} parent=1 // pred_check_branch
      %14 = sbr.rel (0) target = $region9
    $region8: #{feed_forward_network.1} parent=1 // pred_region
      _
    $region9: #{feed_forward_network.1} parent=1 // pred_fallthru
      _
    // Predicated region
    $region10: #{feed_forward_network.1} parent=1 // pred_check
      _
    $region11: #{feed_forward_network.1} parent=1 // pred_check_branch
      %16 = sbr.rel (0) target = $region13
    $region12: #{feed_forward_network.1} parent=1 // pred_region
      _
    $region13: #{feed_forward_network.1} parent=1 // pred_fallthru
      _
    // Predicated region
    $region14: #{feed_forward_network.1} parent=1 // pred_check
      _
    $region15: #{feed_forward_network.1} parent=1 // pred_check_branch
      %18 = sbr.rel (0) target = $region17
    $region16: #{feed_forward_network.1} parent=1 // pred_region
      %s20 = ssub.s32 1024, 1024
      %21 = vsyncadd [#allocation4], %s20
      %s22 = sshll.u32 [#allocation3], 4
      %s23 = int_to_ptr.vmem [resolvable:$true] %s22
      %28 = dma.hbm_to_vmem [thread:$0]  %s3, 1024, %s23, [#allocation4], 64, 64, 4
    $region17: #{feed_forward_network.1} parent=1 // pred_fallthru
      _
    // Predicated region
    $region18: #{feed_forward_network.1} parent=1 // pred_check
      _
    $region19: #{feed_forward_network.1} parent=1 // pred_check_branch
      %30 = sbr.rel (0) target = $region21
    $region20: #{feed_forward_network.1} parent=1 // pred_region
      _
    $region21: #{feed_forward_network.1} parent=1 // pred_fallthru
      _
    // Predicated region
    $region22: #{feed_forward_network.1} parent=1 // pred_check
      _
    $region23: #{feed_forward_network.1} parent=1 // pred_check_branch
      %32 = sbr.rel (0) target = $region25
    $region24: #{feed_forward_network.1} parent=1 // pred_region
      %33 = dma.done [#allocation4], 1024
    $region25: #{feed_forward_network.1} parent=1 // pred_fallthru
      _
    %p35 = scmp.eq.s32.totalorder 0, 0
    // Predicated region
    $region26: #{feed_forward_network.1} parent=1 // pred_check
      %p36 = pneg %p35
    $region27: #{feed_forward_network.1} parent=1 // pred_check_branch
      %38 = sbr.rel (%p36) target = $region29
    $region28: #{feed_forward_network.1} parent=1 // pred_region
      %39 = vst [vmem:[#allocation2] sm:$0xff] 0.0
      %40 = vst [vmem:[#allocation2 + $0x8] sm:$0xff] 0.0
      %41 = vst [vmem:[#allocation2 + $0x10] sm:$0xff] 0.0
      %42 = vst [vmem:[#allocation2 + $0x18] sm:$0xff] 0.0
      %43 = vst [vmem:[#allocation2 + $0x20] sm:$0xff] 0.0
      %44 = vst [vmem:[#allocation2 + $0x28] sm:$0xff] 0.0
      %45 = vst [vmem:[#allocation2 + $0x30] sm:$0xff] 0.0
      %46 = vst [vmem:[#allocation2 + $0x38] sm:$0xff] 0.0
      %47 = vst [vmem:[#allocation2 + $0x40] sm:$0xff] 0.0
      %48 = vst [vmem:[#allocation2 + $0x48] sm:$0xff] 0.0
      %49 = vst [vmem:[#allocation2 + $0x50] sm:$0xff] 0.0
      %50 = vst [vmem:[#allocation2 + $0x58] sm:$0xff] 0.0
      %51 = vst [vmem:[#allocation2 + $0x60] sm:$0xff] 0.0
      %52 = vst [vmem:[#allocation2 + $0x68] sm:$0xff] 0.0
      %53 = vst [vmem:[#allocation2 + $0x70] sm:$0xff] 0.0
      %54 = vst [vmem:[#allocation2 + $0x78] sm:$0xff] 0.0
    $region29: #{feed_forward_network.1} parent=1 // pred_fallthru
      _
    %v55 = vld [vmem:[%s0] sm:$0xf]
    %v56 = vld [vmem:[%s0 + $0x4] sm:$0xf]
    %v57 = vld [vmem:[%s0 + $0x8] sm:$0xf]
    %v58 = vld [vmem:[%s0 + $0xc] sm:$0xf]
    %v59 = vld [vmem:[%s0 + $0x10] sm:$0xf]
    %v60 = vld [vmem:[%s0 + $0x14] sm:$0xf]
    %v61 = vld [vmem:[%s0 + $0x18] sm:$0xf]
    %v62 = vld [vmem:[%s0 + $0x1c] sm:$0xf]
    %v63 = vld [vmem:[%s0 + $0x20] sm:$0xf]
    %v64 = vld [vmem:[%s0 + $0x24] sm:$0xf]
    %v65 = vld [vmem:[%s0 + $0x28] sm:$0xf]
    %v66 = vld [vmem:[%s0 + $0x2c] sm:$0xf]
    %v67 = vld [vmem:[%s0 + $0x30] sm:$0xf]
    %v68 = vld [vmem:[%s0 + $0x34] sm:$0xf]
    %v69 = vld [vmem:[%s0 + $0x38] sm:$0xf]
    %v70 = vld [vmem:[%s0 + $0x3c] sm:$0xf]
    %v71 = vld [vmem:[%s1] sm:$0xf]
    %v72 = vld [vmem:[%s1 + $0x4] sm:$0xf]
    %v73 = vld [vmem:[%s1 + $0x8] sm:$0xf]
    %v74 = vld [vmem:[%s1 + $0xc] sm:$0xf]
    %v75 = vld [vmem:[%s1 + $0x10] sm:$0xf]
    %v76 = vld [vmem:[%s1 + $0x14] sm:$0xf]
    %v77 = vld [vmem:[%s1 + $0x18] sm:$0xf]
    %v78 = vld [vmem:[%s1 + $0x1c] sm:$0xf]
    %v79 = vld [vmem:[%s1 + $0x20] sm:$0xf]
    %v80 = vld [vmem:[%s1 + $0x24] sm:$0xf]
    %v81 = vld [vmem:[%s1 + $0x28] sm:$0xf]
    %v82 = vld [vmem:[%s1 + $0x2c] sm:$0xf]
    %v83 = vld [vmem:[%s1 + $0x30] sm:$0xf]
    %v84 = vld [vmem:[%s1 + $0x34] sm:$0xf]
    %v85 = vld [vmem:[%s1 + $0x38] sm:$0xf]
    %v86 = vld [vmem:[%s1 + $0x3c] sm:$0xf]
    %v87 = vld [vmem:[%s2] sm:$0x1]
    %v88 = vunpack.c.l.bf16 %v87
    %v89 = vlaneseq
    %v90 = vshrl.u32 %v89, 7
    %v91 = vsub.s32 0, %v90
    %v92 = vrot.slane %v88, %v91
    %v109 = vunpack.c.l.b16 %v55
    %v110 = vunpack.c.l.b16 %v56
    %v111 = vunpack.c.l.b16 %v57
    %v112 = vunpack.c.l.b16 %v58
    %v113 = vunpack.c.l.b16 %v59
    %v114 = vunpack.c.l.b16 %v60
    %v115 = vunpack.c.l.b16 %v61
    %v116 = vunpack.c.l.b16 %v62
    %v117 = vunpack.c.l.b16 %v63
    %v118 = vunpack.c.l.b16 %v64
    %v119 = vunpack.c.l.b16 %v65
    %v120 = vunpack.c.l.b16 %v66
    %v121 = vunpack.c.l.b16 %v67
    %v122 = vunpack.c.l.b16 %v68
    %v123 = vunpack.c.l.b16 %v69
    %v124 = vunpack.c.l.b16 %v70
    %v125 = vpack.c.b16 %v110, %v109
    %v126 = vpack.c.b16 %v112, %v111
    %v127 = vpack.c.b16 %v114, %v113
    %v128 = vpack.c.b16 %v116, %v115
    %v129 = vpack.c.b16 %v118, %v117
    %v130 = vpack.c.b16 %v120, %v119
    %v131 = vpack.c.b16 %v122, %v121
    %v132 = vpack.c.b16 %v124, %v123
    %v157 = vunpack.c.l.b16 %v71
    %v158 = vunpack.c.l.b16 %v72
    %v159 = vunpack.c.l.b16 %v73
    %v160 = vunpack.c.l.b16 %v74
    %v161 = vunpack.c.l.b16 %v75
    %v162 = vunpack.c.l.b16 %v76
    %v163 = vunpack.c.l.b16 %v77
    %v164 = vunpack.c.l.b16 %v78
    %v165 = vunpack.c.l.b16 %v79
    %v166 = vunpack.c.l.b16 %v80
    %v167 = vunpack.c.l.b16 %v81
    %v168 = vunpack.c.l.b16 %v82
    %v169 = vunpack.c.l.b16 %v83
    %v170 = vunpack.c.l.b16 %v84
    %v171 = vunpack.c.l.b16 %v85
    %v172 = vunpack.c.l.b16 %v86
    %v173 = vpack.c.b16 %v158, %v157
    %v174 = vpack.c.b16 %v160, %v159
    %v175 = vpack.c.b16 %v162, %v161
    %v176 = vpack.c.b16 %v164, %v163
    %v177 = vpack.c.b16 %v166, %v165
    %v178 = vpack.c.b16 %v168, %v167
    %v179 = vpack.c.b16 %v170, %v169
    %v180 = vpack.c.b16 %v172, %v171
    %189 = vmatprep.subr.bf16.mxu0 0
    %190 = vmatpush1.bf16.msra.mxu0 %v173
    %191 = vmatprep.subr.bf16.mxu0 0
    %192 = vmatpush1.bf16.msra.mxu0 %v174
    %193 = vmatprep.subr.bf16.mxu0 0
    %194 = vmatpush1.bf16.msra.mxu0 %v175
    %195 = vmatprep.subr.bf16.mxu0 0
    %196 = vmatpush1.bf16.msra.mxu0 %v176
    %197 = vmatprep.subr.bf16.mxu0 0
    %198 = vmatpush1.bf16.msra.mxu0 %v177
    %199 = vmatprep.subr.bf16.mxu0 0
    %200 = vmatpush1.bf16.msra.mxu0 %v178
    %201 = vmatprep.subr.bf16.mxu0 0
    %202 = vmatpush1.bf16.msra.mxu0 %v179
    %203 = vmatprep.subr.bf16.mxu0 0
    %204 = vmatpush1.bf16.msra.mxu0 %v180
    %205 = vmatprep.subr.bf16.mxu0 0
    %206 = vmatpush1.bf16.msra.mxu0 0
    %207 = vmatprep.subr.bf16.mxu0 0
    %208 = vmatpush1.bf16.msra.mxu0 0
    %209 = vmatprep.subr.bf16.mxu0 0
    %210 = vmatpush1.bf16.msra.mxu0 0
    %211 = vmatprep.subr.bf16.mxu0 0
    %212 = vmatpush1.bf16.msra.mxu0 0
    %213 = vmatprep.subr.bf16.mxu0 0
    %214 = vmatpush1.bf16.msra.mxu0 0
    %215 = vmatprep.subr.bf16.mxu0 0
    %216 = vmatpush1.bf16.msra.mxu0 0
    %217 = vmatprep.subr.bf16.mxu0 0
    %218 = vmatpush1.bf16.msra.mxu0 0
    %219 = vmatprep.subr.bf16.mxu0 0
    %220 = vmatpush1.bf16.msra.mxu0 0
    %221 = vmatprep.mubr.bf16.mxu0 0
    %222 = vmatmul.mubr.bf16.gmra.mrb[0].mxu0 %v125
    %v223 = vpop.f32.mrb[0].mxu0
    %v224 = vadd.f32 %v92, %v223
    %v225 = vpop.f32.mrb[0].mxu0
    %v226 = vpop.f32.mrb[0].mxu0
    %v227 = vadd.f32 %v92, %v226
    %v228 = vpop.f32.mrb[0].mxu0
    %229 = vmatprep.mubr.bf16.mxu0 0
    %230 = vmatmul.mubr.bf16.gmra.mrb[0].mxu0 %v126
    %v231 = vpop.f32.mrb[0].mxu0
    %v232 = vadd.f32 %v92, %v231
    %v233 = vpop.f32.mrb[0].mxu0
    %v234 = vpop.f32.mrb[0].mxu0
    %v235 = vadd.f32 %v92, %v234
    %v236 = vpop.f32.mrb[0].mxu0
    %237 = vmatprep.mubr.bf16.mxu0 0
    %238 = vmatmul.mubr.bf16.gmra.mrb[0].mxu0 %v127
    %v239 = vpop.f32.mrb[0].mxu0
    %v240 = vadd.f32 %v92, %v239
    %v241 = vpop.f32.mrb[0].mxu0
    %v242 = vpop.f32.mrb[0].mxu0
    %v243 = vadd.f32 %v92, %v242
    %v244 = vpop.f32.mrb[0].mxu0
    %245 = vmatprep.mubr.bf16.mxu0 0
    %246 = vmatmul.mubr.bf16.gmra.mrb[0].mxu0 %v128
    %v247 = vpop.f32.mrb[0].mxu0
    %v248 = vadd.f32 %v92, %v247
    %v249 = vpop.f32.mrb[0].mxu0
    %v250 = vpop.f32.mrb[0].mxu0
    %v251 = vadd.f32 %v92, %v250
    %v252 = vpop.f32.mrb[0].mxu0
    %253 = vmatprep.mubr.bf16.mxu0 0
    %254 = vmatmul.mubr.bf16.gmra.mrb[0].mxu0 %v129
    %v255 = vpop.f32.mrb[0].mxu0
    %v256 = vadd.f32 %v92, %v255
    %v257 = vpop.f32.mrb[0].mxu0
    %v258 = vpop.f32.mrb[0].mxu0
    %v259 = vadd.f32 %v92, %v258
    %v260 = vpop.f32.mrb[0].mxu0
    %261 = vmatprep.mubr.bf16.mxu0 0
    %262 = vmatmul.mubr.bf16.gmra.mrb[0].mxu0 %v130
    %v263 = vpop.f32.mrb[0].mxu0
    %v264 = vadd.f32 %v92, %v263
    %v265 = vpop.f32.mrb[0].mxu0
    %v266 = vpop.f32.mrb[0].mxu0
    %v267 = vadd.f32 %v92, %v266
    %v268 = vpop.f32.mrb[0].mxu0
    %269 = vmatprep.mubr.bf16.mxu0 0
    %270 = vmatmul.mubr.bf16.gmra.mrb[0].mxu0 %v131
    %v271 = vpop.f32.mrb[0].mxu0
    %v272 = vadd.f32 %v92, %v271
    %v273 = vpop.f32.mrb[0].mxu0
    %v274 = vpop.f32.mrb[0].mxu0
    %v275 = vadd.f32 %v92, %v274
    %v276 = vpop.f32.mrb[0].mxu0
    %277 = vmatprep.mubr.bf16.mxu0 0
    %278 = vmatmul.mubr.bf16.gmra.mrb[0].mxu0 %v132
    %v279 = vpop.f32.mrb[0].mxu0
    %v280 = vadd.f32 %v92, %v279
    %v281 = vpop.f32.mrb[0].mxu0
    %v282 = vpop.f32.mrb[0].mxu0
    %v283 = vadd.f32 %v92, %v282
    %v284 = vpop.f32.mrb[0].mxu0
    %285 = vdwg.mxu0
    %v286 = vmul.f32 %v224, 0.5
    %v287 = vmul.f32 %v227, 0.5
    %v288 = vmul.f32 %v232, 0.5
    %v289 = vmul.f32 %v235, 0.5
    %v290 = vmul.f32 %v240, 0.5
    %v291 = vmul.f32 %v243, 0.5
    %v292 = vmul.f32 %v248, 0.5
    %v293 = vmul.f32 %v251, 0.5
    %v294 = vmul.f32 %v256, 0.5
    %v295 = vmul.f32 %v259, 0.5
    %v296 = vmul.f32 %v264, 0.5
    %v297 = vmul.f32 %v267, 0.5
    %v298 = vmul.f32 %v272, 0.5
    %v299 = vmul.f32 %v275, 0.5
    %v300 = vmul.f32 %v280, 0.5
    %v301 = vmul.f32 %v283, 0.5
    %v302 = vmul.f32 %v224, 0.70710677
    %v303 = vmul.f32 %v227, 0.70710677
    %v304 = vmul.f32 %v232, 0.70710677
    %v305 = vmul.f32 %v235, 0.70710677
    %v306 = vmul.f32 %v240, 0.70710677
    %v307 = vmul.f32 %v243, 0.70710677
    %v308 = vmul.f32 %v248, 0.70710677
    %v309 = vmul.f32 %v251, 0.70710677
    %v310 = vmul.f32 %v256, 0.70710677
    %v311 = vmul.f32 %v259, 0.70710677
    %v312 = vmul.f32 %v264, 0.70710677
    %v313 = vmul.f32 %v267, 0.70710677
    %v314 = vmul.f32 %v272, 0.70710677
    %v315 = vmul.f32 %v275, 0.70710677
    %v316 = vmul.f32 %v280, 0.70710677
    %v317 = vmul.f32 %v283, 0.70710677
    %v318 = verf.f32.pop %v302
    %v319 = verf.f32.pop %v303
    %v320 = verf.f32.pop %v304
    %v321 = verf.f32.pop %v305
    %v322 = verf.f32.pop %v306
    %v323 = verf.f32.pop %v307
    %v324 = verf.f32.pop %v308
    %v325 = verf.f32.pop %v309
    %v326 = verf.f32.pop %v310
    %v327 = verf.f32.pop %v311
    %v328 = verf.f32.pop %v312
    %v329 = verf.f32.pop %v313
    %v330 = verf.f32.pop %v314
    %v331 = verf.f32.pop %v315
    %v332 = verf.f32.pop %v316
    %v333 = verf.f32.pop %v317
    %v334 = vadd.f32 %v318, 1.0
    %v335 = vadd.f32 %v319, 1.0
    %v336 = vadd.f32 %v320, 1.0
    %v337 = vadd.f32 %v321, 1.0
    %v338 = vadd.f32 %v322, 1.0
    %v339 = vadd.f32 %v323, 1.0
    %v340 = vadd.f32 %v324, 1.0
    %v341 = vadd.f32 %v325, 1.0
    %v342 = vadd.f32 %v326, 1.0
    %v343 = vadd.f32 %v327, 1.0
    %v344 = vadd.f32 %v328, 1.0
    %v345 = vadd.f32 %v329, 1.0
    %v346 = vadd.f32 %v330, 1.0
    %v347 = vadd.f32 %v331, 1.0
    %v348 = vadd.f32 %v332, 1.0
    %v349 = vadd.f32 %v333, 1.0
    %v350 = vmul.f32 %v286, %v334
    %v351 = vmul.f32 %v287, %v335
    %v352 = vmul.f32 %v288, %v336
    %v353 = vmul.f32 %v289, %v337
    %v354 = vmul.f32 %v290, %v338
    %v355 = vmul.f32 %v291, %v339
    %v356 = vmul.f32 %v292, %v340
    %v357 = vmul.f32 %v293, %v341
    %v358 = vmul.f32 %v294, %v342
    %v359 = vmul.f32 %v295, %v343
    %v360 = vmul.f32 %v296, %v344
    %v361 = vmul.f32 %v297, %v345
    %v362 = vmul.f32 %v298, %v346
    %v363 = vmul.f32 %v299, %v347
    %v364 = vmul.f32 %v300, %v348
    %v365 = vmul.f32 %v301, %v349
    %v366 = vld [vmem:[#allocation2] sm:$0xff]
    %v367 = vld [vmem:[#allocation2 + $0x8] sm:$0xff]
    %v368 = vld [vmem:[#allocation2 + $0x10] sm:$0xff]
    %v369 = vld [vmem:[#allocation2 + $0x18] sm:$0xff]
    %v370 = vld [vmem:[#allocation2 + $0x20] sm:$0xff]
    %v371 = vld [vmem:[#allocation2 + $0x28] sm:$0xff]
    %v372 = vld [vmem:[#allocation2 + $0x30] sm:$0xff]
    %v373 = vld [vmem:[#allocation2 + $0x38] sm:$0xff]
    %v374 = vld [vmem:[#allocation2 + $0x40] sm:$0xff]
    %v375 = vld [vmem:[#allocation2 + $0x48] sm:$0xff]
    %v376 = vld [vmem:[#allocation2 + $0x50] sm:$0xff]
    %v377 = vld [vmem:[#allocation2 + $0x58] sm:$0xff]
    %v378 = vld [vmem:[#allocation2 + $0x60] sm:$0xff]
    %v379 = vld [vmem:[#allocation2 + $0x68] sm:$0xff]
    %v380 = vld [vmem:[#allocation2 + $0x70] sm:$0xff]
    %v381 = vld [vmem:[#allocation2 + $0x78] sm:$0xff]
    %v382 = vpack.c.bf16 %v351, %v350
    %v383 = vpack.c.bf16 %v353, %v352
    %v384 = vpack.c.bf16 %v355, %v354
    %v385 = vpack.c.bf16 %v357, %v356
    %v386 = vpack.c.bf16 %v359, %v358
    %v387 = vpack.c.bf16 %v361, %v360
    %v388 = vpack.c.bf16 %v363, %v362
    %v389 = vpack.c.bf16 %v365, %v364
    %v390 = vld [vmem:[#allocation3] sm:$0xf]
    %v391 = vld [vmem:[#allocation3 + $0x4] sm:$0xf]
    %v392 = vld [vmem:[#allocation3 + $0x8] sm:$0xf]
    %v393 = vld [vmem:[#allocation3 + $0xc] sm:$0xf]
    %v394 = vld [vmem:[#allocation3 + $0x10] sm:$0xf]
    %v395 = vld [vmem:[#allocation3 + $0x14] sm:$0xf]
    %v396 = vld [vmem:[#allocation3 + $0x18] sm:$0xf]
    %v397 = vld [vmem:[#allocation3 + $0x1c] sm:$0xf]
    %v398 = vld [vmem:[#allocation3 + $0x20] sm:$0xf]
    %v399 = vld [vmem:[#allocation3 + $0x24] sm:$0xf]
    %v400 = vld [vmem:[#allocation3 + $0x28] sm:$0xf]
    %v401 = vld [vmem:[#allocation3 + $0x2c] sm:$0xf]
    %v402 = vld [vmem:[#allocation3 + $0x30] sm:$0xf]
    %v403 = vld [vmem:[#allocation3 + $0x34] sm:$0xf]
    %v404 = vld [vmem:[#allocation3 + $0x38] sm:$0xf]
    %v405 = vld [vmem:[#allocation3 + $0x3c] sm:$0xf]
    %v422 = vunpack.c.l.b16 %v390
    %v423 = vunpack.c.l.b16 %v391
    %v424 = vunpack.c.l.b16 %v392
    %v425 = vunpack.c.l.b16 %v393
    %v426 = vunpack.c.l.b16 %v394
    %v427 = vunpack.c.l.b16 %v395
    %v428 = vunpack.c.l.b16 %v396
    %v429 = vunpack.c.l.b16 %v397
    %v430 = vunpack.c.l.b16 %v398
    %v431 = vunpack.c.l.b16 %v399
    %v432 = vunpack.c.l.b16 %v400
    %v433 = vunpack.c.l.b16 %v401
    %v434 = vunpack.c.l.b16 %v402
    %v435 = vunpack.c.l.b16 %v403
    %v436 = vunpack.c.l.b16 %v404
    %v437 = vunpack.c.l.b16 %v405
    %v438 = vpack.c.b16 %v423, %v422
    %v439 = vpack.c.b16 %v425, %v424
    %v440 = vpack.c.b16 %v427, %v426
    %v441 = vpack.c.b16 %v429, %v428
    %v442 = vpack.c.b16 %v431, %v430
    %v443 = vpack.c.b16 %v433, %v432
    %v444 = vpack.c.b16 %v435, %v434
    %v445 = vpack.c.b16 %v437, %v436
    %454 = vmatprep.subr.bf16.mxu0 0
    %455 = vmatpush1.bf16.msra.mxu0 %v438
    %456 = vmatprep.subr.bf16.mxu0 0
    %457 = vmatpush1.bf16.msra.mxu0 %v439
    %458 = vmatprep.subr.bf16.mxu0 0
    %459 = vmatpush1.bf16.msra.mxu0 %v440
    %460 = vmatprep.subr.bf16.mxu0 0
    %461 = vmatpush1.bf16.msra.mxu0 %v441
    %462 = vmatprep.subr.bf16.mxu0 0
    %463 = vmatpush1.bf16.msra.mxu0 %v442
    %464 = vmatprep.subr.bf16.mxu0 0
    %465 = vmatpush1.bf16.msra.mxu0 %v443
    %466 = vmatprep.subr.bf16.mxu0 0
    %467 = vmatpush1.bf16.msra.mxu0 %v444
    %468 = vmatprep.subr.bf16.mxu0 0
    %469 = vmatpush1.bf16.msra.mxu0 %v445
    %470 = vmatprep.subr.bf16.mxu0 0
    %471 = vmatpush1.bf16.msra.mxu0 0
    %472 = vmatprep.subr.bf16.mxu0 0
    %473 = vmatpush1.bf16.msra.mxu0 0
    %474 = vmatprep.subr.bf16.mxu0 0
    %475 = vmatpush1.bf16.msra.mxu0 0
    %476 = vmatprep.subr.bf16.mxu0 0
    %477 = vmatpush1.bf16.msra.mxu0 0
    %478 = vmatprep.subr.bf16.mxu0 0
    %479 = vmatpush1.bf16.msra.mxu0 0
    %480 = vmatprep.subr.bf16.mxu0 0
    %481 = vmatpush1.bf16.msra.mxu0 0
    %482 = vmatprep.subr.bf16.mxu0 0
    %483 = vmatpush1.bf16.msra.mxu0 0
    %484 = vmatprep.subr.bf16.mxu0 0
    %485 = vmatpush1.bf16.msra.mxu0 0
    %486 = vmatprep.mubr.bf16.mxu0 0
    %487 = vmatmul.mubr.bf16.gmra.mrb[0].mxu0 %v382
    %v488 = vpop.f32.mrb[0].mxu0
    %v489 = vadd.f32 0.0, %v488
    %v490 = vpop.f32.mrb[0].mxu0
    %v491 = vpop.f32.mrb[0].mxu0
    %v492 = vadd.f32 0.0, %v491
    %v493 = vpop.f32.mrb[0].mxu0
    %494 = vmatprep.mubr.bf16.mxu0 0
    %495 = vmatmul.mubr.bf16.gmra.mrb[0].mxu0 %v383
    %v496 = vpop.f32.mrb[0].mxu0
    %v497 = vadd.f32 0.0, %v496
    %v498 = vpop.f32.mrb[0].mxu0
    %v499 = vpop.f32.mrb[0].mxu0
    %v500 = vadd.f32 0.0, %v499
    %v501 = vpop.f32.mrb[0].mxu0
    %502 = vmatprep.mubr.bf16.mxu0 0
    %503 = vmatmul.mubr.bf16.gmra.mrb[0].mxu0 %v384
    %v504 = vpop.f32.mrb[0].mxu0
    %v505 = vadd.f32 0.0, %v504
    %v506 = vpop.f32.mrb[0].mxu0
    %v507 = vpop.f32.mrb[0].mxu0
    %v508 = vadd.f32 0.0, %v507
    %v509 = vpop.f32.mrb[0].mxu0
    %510 = vmatprep.mubr.bf16.mxu0 0
    %511 = vmatmul.mubr.bf16.gmra.mrb[0].mxu0 %v385
    %v512 = vpop.f32.mrb[0].mxu0
    %v513 = vadd.f32 0.0, %v512
    %v514 = vpop.f32.mrb[0].mxu0
    %v515 = vpop.f32.mrb[0].mxu0
    %v516 = vadd.f32 0.0, %v515
    %v517 = vpop.f32.mrb[0].mxu0
    %518 = vmatprep.mubr.bf16.mxu0 0
    %519 = vmatmul.mubr.bf16.gmra.mrb[0].mxu0 %v386
    %v520 = vpop.f32.mrb[0].mxu0
    %v521 = vadd.f32 0.0, %v520
    %v522 = vpop.f32.mrb[0].mxu0
    %v523 = vpop.f32.mrb[0].mxu0
    %v524 = vadd.f32 0.0, %v523
    %v525 = vpop.f32.mrb[0].mxu0
    %526 = vmatprep.mubr.bf16.mxu0 0
    %527 = vmatmul.mubr.bf16.gmra.mrb[0].mxu0 %v387
    %v528 = vpop.f32.mrb[0].mxu0
    %v529 = vadd.f32 0.0, %v528
    %v530 = vpop.f32.mrb[0].mxu0
    %v531 = vpop.f32.mrb[0].mxu0
    %v532 = vadd.f32 0.0, %v531
    %v533 = vpop.f32.mrb[0].mxu0
    %534 = vmatprep.mubr.bf16.mxu0 0
    %535 = vmatmul.mubr.bf16.gmra.mrb[0].mxu0 %v388
    %v536 = vpop.f32.mrb[0].mxu0
    %v537 = vadd.f32 0.0, %v536
    %v538 = vpop.f32.mrb[0].mxu0
    %v539 = vpop.f32.mrb[0].mxu0
    %v540 = vadd.f32 0.0, %v539
    %v541 = vpop.f32.mrb[0].mxu0
    %542 = vmatprep.mubr.bf16.mxu0 0
    %543 = vmatmul.mubr.bf16.gmra.mrb[0].mxu0 %v389
    %v544 = vpop.f32.mrb[0].mxu0
    %v545 = vadd.f32 0.0, %v544
    %v546 = vpop.f32.mrb[0].mxu0
    %v547 = vpop.f32.mrb[0].mxu0
    %v548 = vadd.f32 0.0, %v547
    %v549 = vpop.f32.mrb[0].mxu0
    %550 = vdwg.mxu0
    %v551 = vadd.f32 %v366, %v489
    %v552 = vadd.f32 %v367, %v492
    %v553 = vadd.f32 %v368, %v497
    %v554 = vadd.f32 %v369, %v500
    %v555 = vadd.f32 %v370, %v505
    %v556 = vadd.f32 %v371, %v508
    %v557 = vadd.f32 %v372, %v513
    %v558 = vadd.f32 %v373, %v516
    %v559 = vadd.f32 %v374, %v521
    %v560 = vadd.f32 %v375, %v524
    %v561 = vadd.f32 %v376, %v529
    %v562 = vadd.f32 %v377, %v532
    %v563 = vadd.f32 %v378, %v537
    %v564 = vadd.f32 %v379, %v540
    %v565 = vadd.f32 %v380, %v545
    %v566 = vadd.f32 %v381, %v548
    %567 = vst [vmem:[#allocation2] sm:$0xff] %v551
    %568 = vst [vmem:[#allocation2 + $0x8] sm:$0xff] %v552
    %569 = vst [vmem:[#allocation2 + $0x10] sm:$0xff] %v553
    %570 = vst [vmem:[#allocation2 + $0x18] sm:$0xff] %v554
    %571 = vst [vmem:[#allocation2 + $0x20] sm:$0xff] %v555
    %572 = vst [vmem:[#allocation2 + $0x28] sm:$0xff] %v556
    %573 = vst [vmem:[#allocation2 + $0x30] sm:$0xff] %v557
    %574 = vst [vmem:[#allocation2 + $0x38] sm:$0xff] %v558
    %575 = vst [vmem:[#allocation2 + $0x40] sm:$0xff] %v559
    %576 = vst [vmem:[#allocation2 + $0x48] sm:$0xff] %v560
    %577 = vst [vmem:[#allocation2 + $0x50] sm:$0xff] %v561
    %578 = vst [vmem:[#allocation2 + $0x58] sm:$0xff] %v562
    %579 = vst [vmem:[#allocation2 + $0x60] sm:$0xff] %v563
    %580 = vst [vmem:[#allocation2 + $0x68] sm:$0xff] %v564
    %581 = vst [vmem:[#allocation2 + $0x70] sm:$0xff] %v565
    %582 = vst [vmem:[#allocation2 + $0x78] sm:$0xff] %v566
    // Predicated region
    $region30: #{feed_forward_network.1} parent=1 // pred_check
      %p583 = pneg %p35
    $region31: #{feed_forward_network.1} parent=1 // pred_check_branch
      %585 = sbr.rel (%p583) target = $region33
    $region32: #{feed_forward_network.1} parent=1 // pred_region
      %v586 = vld [vmem:[#allocation2] sm:$0xff]
      %v587 = vld [vmem:[#allocation2 + $0x8] sm:$0xff]
      %v588 = vld [vmem:[#allocation2 + $0x10] sm:$0xff]
      %v589 = vld [vmem:[#allocation2 + $0x18] sm:$0xff]
      %v590 = vld [vmem:[#allocation2 + $0x20] sm:$0xff]
      %v591 = vld [vmem:[#allocation2 + $0x28] sm:$0xff]
      %v592 = vld [vmem:[#allocation2 + $0x30] sm:$0xff]
      %v593 = vld [vmem:[#allocation2 + $0x38] sm:$0xff]
      %v594 = vld [vmem:[#allocation2 + $0x40] sm:$0xff]
      %v595 = vld [vmem:[#allocation2 + $0x48] sm:$0xff]
      %v596 = vld [vmem:[#allocation2 + $0x50] sm:$0xff]
      %v597 = vld [vmem:[#allocation2 + $0x58] sm:$0xff]
      %v598 = vld [vmem:[#allocation2 + $0x60] sm:$0xff]
      %v599 = vld [vmem:[#allocation2 + $0x68] sm:$0xff]
      %v600 = vld [vmem:[#allocation2 + $0x70] sm:$0xff]
      %v601 = vld [vmem:[#allocation2 + $0x78] sm:$0xff]
      %v602 = vld [vmem:[%s4] sm:$0x1]
      %v603 = vunpack.c.l.bf16 %v602
      %v604 = vlaneseq
      %v605 = vshrl.u32 %v604, 7
      %v606 = vsub.s32 0, %v605
      %v607 = vrot.slane %v603, %v606
      %v608 = vadd.f32 %v586, %v607
      %v609 = vadd.f32 %v587, %v607
      %v610 = vadd.f32 %v588, %v607
      %v611 = vadd.f32 %v589, %v607
      %v612 = vadd.f32 %v590, %v607
      %v613 = vadd.f32 %v591, %v607
      %v614 = vadd.f32 %v592, %v607
      %v615 = vadd.f32 %v593, %v607
      %v616 = vadd.f32 %v594, %v607
      %v617 = vadd.f32 %v595, %v607
      %v618 = vadd.f32 %v596, %v607
      %v619 = vadd.f32 %v597, %v607
      %v620 = vadd.f32 %v598, %v607
      %v621 = vadd.f32 %v599, %v607
      %v622 = vadd.f32 %v600, %v607
      %v623 = vadd.f32 %v601, %v607
      %624 = vst [vmem:[%s5] sm:$0xff] %v608
      %625 = vst [vmem:[%s5 + $0x8] sm:$0xff] %v609
      %626 = vst [vmem:[%s5 + $0x10] sm:$0xff] %v610
      %627 = vst [vmem:[%s5 + $0x18] sm:$0xff] %v611
      %628 = vst [vmem:[%s5 + $0x20] sm:$0xff] %v612
      %629 = vst [vmem:[%s5 + $0x28] sm:$0xff] %v613
      %630 = vst [vmem:[%s5 + $0x30] sm:$0xff] %v614
      %631 = vst [vmem:[%s5 + $0x38] sm:$0xff] %v615
      %632 = vst [vmem:[%s5 + $0x40] sm:$0xff] %v616
      %633 = vst [vmem:[%s5 + $0x48] sm:$0xff] %v617
      %634 = vst [vmem:[%s5 + $0x50] sm:$0xff] %v618
      %635 = vst [vmem:[%s5 + $0x58] sm:$0xff] %v619
      %636 = vst [vmem:[%s5 + $0x60] sm:$0xff] %v620
      %637 = vst [vmem:[%s5 + $0x68] sm:$0xff] %v621
      %638 = vst [vmem:[%s5 + $0x70] sm:$0xff] %v622
      %639 = vst [vmem:[%s5 + $0x78] sm:$0xff] %v623
    $region33: #{feed_forward_network.1} parent=1 // pred_fallthru
      _
    // Predicated region
    $region34: #{feed_forward_network.1} parent=1 // pred_check
      _
    $region35: #{feed_forward_network.1} parent=1 // pred_check_branch
      %641 = sbr.rel (0) target = $region37
    $region36: #{feed_forward_network.1} parent=1 // pred_region
      _
    $region37: #{feed_forward_network.1} parent=1 // pred_fallthru
      _
    // Predicated region
    $region38: #{feed_forward_network.1} parent=1 // pred_check
      _
    $region39: #{feed_forward_network.1} parent=1 // pred_check_branch
      %643 = sbr.rel (0) target = $region41
    $region40: #{feed_forward_network.1} parent=1 // pred_region
      _
    $region41: #{feed_forward_network.1} parent=1 // pred_fallthru
      _
    %644 = vsyncpa [#allocation4], 1

</llo_original>
